<compile_context>
chip_gen: v7x
topology: tpu7x:2x2x1
jax: 0.10.0
libtpu: 0.0.40
codegen_flags: <defaults>
</compile_context>

<pallas_src>
import jax
import jax.numpy as jnp
from jax.experimental import pallas as pl
from jax.experimental.pallas import tpu as pltpu

_LANE = 128


def _round_up(x, m):
    return (x + m - 1) // m * m


def _vmem_cap_bytes():
    # ~60% of physical VMEM when the runtime can tell us (v7x has only 64 MiB
    # per TensorCore vs 128 MiB on v5e/v6e); conservative fallback otherwise.
    try:
        return int(pltpu.get_tpu_info().vmem_capacity_bytes * 0.6)
    except Exception:
        return 32 * 1024 * 1024


def netd_images_kernel(x_ref, w1_ref, b1_ref, w2_ref, b2_ref, w3_ref, b3_ref,
                       out_ref, h1_ref):
    x = x_ref[...]                                       # (L, bm) f32, batch on lanes

    # h1 = tanh(W1 @ x + b1)   -- MXU matmul, EUP tanh on lane-dense vregs.
    h1 = jnp.tanh(
        jnp.dot(w1_ref[...], x, preferred_element_type=jnp.float32)
        + b1_ref[...])                                   # (K, bm)
    # h2 = tanh(W2 @ h1 + b2)
    h2 = jnp.tanh(
        jnp.dot(w2_ref[...], h1, preferred_element_type=jnp.float32)
        + b2_ref[...])                                   # (K, bm)
    # out = w3 . h2 + b3 : VPU broadcast-multiply + reduce over K (sublanes)
    # instead of wasting an MXU pass on a single output row.
    out = jnp.sum(h2 * w3_ref[...], axis=0, keepdims=True) + b3_ref[0]   # (1, bm)

    h1_ref[...] = h1.astype(h1_ref.dtype)
    out_ref[...] = out.astype(out_ref.dtype)


def netd_images_forward(x, w1, b1, w2, b2, w3, b3):
    """Fused 3-layer MLP.

    x:  (N, L) float32
    w1: (K, L), b1: (K,)    -- PyTorch nn.Linear layout (out_features, in_features)
    w2: (K, K), b2: (K,)
    w3: (1, K), b3: (1,)
    Returns (output (N, 1), h1 (N, K)).
    """
    N, L = x.shape
    K = w1.shape[0]

    # Feature-major: put the batch on the 128-lane axis.
    x_fm = x.T                                           # (L, N)

    # Batch columns per grid step, derived from a VMEM budget for the
    # double-buffered activation tiles (x, h1, out) rather than a fixed cap.
    bytes_per_col = 4 * (L + K + 1)
    cap = max(_LANE,
              min(8192, (8 * 1024 * 1024) // (2 * bytes_per_col) // _LANE * _LANE))
    if N <= 2 * _LANE:
        # Tiny batch: single grid step whose block equals the full (unpadded)
        # batch -> no wrapper pad and no output slicing.
        block_m = N
    else:
        # >= 2 steps so the "parallel" batch axis shards across both
        # TensorCores on v7x; lane-aligned block -> unmasked stores.
        steps = max(2, pl.cdiv(N, cap))
        block_m = _round_up(pl.cdiv(N, steps), _LANE)

    n_pad = _round_up(N, block_m)
    if n_pad != N:
        x_fm = jnp.pad(x_fm, ((0, 0), (0, n_pad - N)))
    grid = (n_pad // block_m,)

    # VMEM request: double-buffered weights + activation tiles with 4x
    # headroom, capped per-generation.
    weight_bytes = 4 * (K * L + K * K + 3 * K)
    act_bytes = 4 * block_m * (L + K + 1)
    vmem_limit = int(min(max(4 * 2 * (weight_bytes + act_bytes),
                             8 * 1024 * 1024),
                         _vmem_cap_bytes()))

    in_specs = [
        pl.BlockSpec((L, block_m), lambda i: (0, i)),        # x (feature-major)
        pl.BlockSpec((K, L), lambda i: (0, 0)),              # W1 (resident)
        pl.BlockSpec((K, 1), lambda i: (0, 0)),              # b1 column
        pl.BlockSpec((K, K), lambda i: (0, 0)),              # W2 (resident)
        pl.BlockSpec((K, 1), lambda i: (0, 0)),              # b2 column
        pl.BlockSpec((K, 1), lambda i: (0, 0)),              # w3 column
        pl.BlockSpec(memory_space=pltpu.MemorySpace.SMEM),   # b3 scalar
    ]
    out_specs = [
        pl.BlockSpec((1, block_m), lambda i: (0, i)),        # out row (lane-dense)
        pl.BlockSpec((K, block_m), lambda i: (0, i)),        # h1 slab (lane-dense)
    ]
    out_shape = [
        jax.ShapeDtypeStruct((1, n_pad), jnp.float32),
        jax.ShapeDtypeStruct((K, n_pad), jnp.float32),
    ]

    out_fm, h1_fm = pl.pallas_call(
        netd_images_kernel,
        grid=grid,
        in_specs=in_specs,
        out_specs=out_specs,
        out_shape=out_shape,
        compiler_params=pltpu.CompilerParams(
            dimension_semantics=("parallel",),
            vmem_limit_bytes=vmem_limit,
        ),
    )(x_fm, w1, b1.reshape(K, 1), w2, b2.reshape(K, 1),
      w3.reshape(K, 1), b3.reshape(1))

    # Back to the PyTorch-facing layout; XLA fuses these with the tail slice.
    out = out_fm[0, :N].reshape(N, 1)
    h1 = h1_fm[:, :N].T
    return out, h1


def init_params(key, L, K, c=0.1):
    """Deterministic uniform(-c, c) init matching initializationhelper(),
    in PyTorch nn.Linear layout (out_features, in_features)."""
    ks = jax.random.split(key, 6)
    w1 = jax.random.uniform(ks[0], (K, L), jnp.float32, -c, c)
    b1 = jax.random.uniform(ks[1], (K,), jnp.float32, -c, c)
    w2 = jax.random.uniform(ks[2], (K, K), jnp.float32, -c, c)
    b2 = jax.random.uniform(ks[3], (K,), jnp.float32, -c, c)
    w3 = jax.random.uniform(ks[4], (1, K), jnp.float32, -c, c)
    b3 = jax.random.uniform(ks[5], (1,), jnp.float32, -c, c)
    return w1, b1, w2, b2, w3, b3


def reference_forward(x, w1, b1, w2, b2, w3, b3):
    h1 = jnp.tanh(x @ w1.T + b1)
    h2 = jnp.tanh(h1 @ w2.T + b2)
    out = h2 @ w3.T + b3
    return out, h1


if __name__ == "__main__":
    # Small shapes consistent with the module: batch N, L input feats, K hidden.
    N, L, K = 16, 32, 32

    key = jax.random.PRNGKey(0)
    k_x, k_p = jax.random.split(key)
    x = jax.random.normal(k_x, (N, L), jnp.float32)
    params = init_params(k_p, L, K)

    out, h1 = netd_images_forward(x, *params)
    out = jax.block_until_ready(out)
    h1 = jax.block_until_ready(h1)

    out_ref, h1_ref = reference_forward(x, *params)
    assert out.shape == (N, 1) and h1.shape == (N, K)
    assert jnp.allclose(out, out_ref, atol=1e-4, rtol=1e-4)
    assert jnp.allclose(h1, h1_ref, atol=1e-4, rtol=1e-4)

    print("KERNEL_OK")
</pallas_src>

<mosaic_0001>
module attributes {stable_mosaic.version = 11 : i64} {
  func.func @netd_images_kernel(%arg0: i32, %arg1: memref<32x16xf32, #tpu.memory_space<vmem>>, %arg2: memref<32x32xf32, #tpu.memory_space<vmem>>, %arg3: memref<32x1xf32, #tpu.memory_space<vmem>>, %arg4: memref<32x32xf32, #tpu.memory_space<vmem>>, %arg5: memref<32x1xf32, #tpu.memory_space<vmem>>, %arg6: memref<32x1xf32, #tpu.memory_space<vmem>>, %arg7: memref<1xf32, #tpu.memory_space<smem>>, %arg8: memref<1x16xf32, #tpu.memory_space<vmem>>, %arg9: memref<32x16xf32, #tpu.memory_space<vmem>>) attributes {dimension_semantics = [#tpu.dimension_semantics<parallel>], iteration_bounds = array<i64: 1>, scalar_prefetch = 0 : i64, scratch_operands = 0 : i64, tpu.core_type = #tpu.core_type<tc>, window_params = [{transform_indices = @transform_0, window_bounds = array<i64: 32, 16>}, {pipeline_mode = #tpu.pipeline_mode<synchronous>, transform_indices = @transform_1, window_bounds = array<i64: 32, 32>}, {pipeline_mode = #tpu.pipeline_mode<synchronous>, transform_indices = @transform_2, window_bounds = array<i64: 32, 1>}, {pipeline_mode = #tpu.pipeline_mode<synchronous>, transform_indices = @transform_3, window_bounds = array<i64: 32, 32>}, {pipeline_mode = #tpu.pipeline_mode<synchronous>, transform_indices = @transform_4, window_bounds = array<i64: 32, 1>}, {pipeline_mode = #tpu.pipeline_mode<synchronous>, transform_indices = @transform_5, window_bounds = array<i64: 32, 1>}, {transform_indices = @transform_6, window_bounds = array<i64: 1>}, {transform_indices = @transform_7, window_bounds = array<i64: 1, 16>}, {transform_indices = @transform_8, window_bounds = array<i64: 32, 16>}]} {
    %c0 = arith.constant 0 : index
    %c0_0 = arith.constant 0 : index
    %0 = vector.load %arg1[%c0, %c0_0] : memref<32x16xf32, #tpu.memory_space<vmem>>, vector<32x16xf32>
    %c0_1 = arith.constant 0 : index
    %c0_2 = arith.constant 0 : index
    %1 = vector.load %arg2[%c0_1, %c0_2] : memref<32x32xf32, #tpu.memory_space<vmem>>, vector<32x32xf32>
    %cst = arith.constant dense<0.000000e+00> : vector<32x16xf32>
    %2 = tpu.matmul %1, %0, %cst {dimension_numbers = #tpu.dot_dimension_numbers<[1], [0], [0], [1], [0, 0, 1, 1], [], []>} : vector<32x32xf32>, vector<32x16xf32>, vector<32x16xf32> -> vector<32x16xf32>
    %c0_3 = arith.constant 0 : index
    %c0_4 = arith.constant 0 : index
    %3 = vector.load %arg3[%c0_3, %c0_4] : memref<32x1xf32, #tpu.memory_space<vmem>>, vector<32x1xf32>
    %4 = vector.broadcast %3 : vector<32x1xf32> to vector<32x16xf32>
    %5 = arith.addf %2, %4 : vector<32x16xf32>
    %6 = math.tanh %5 : vector<32x16xf32>
    %c0_5 = arith.constant 0 : index
    %c0_6 = arith.constant 0 : index
    %7 = vector.load %arg4[%c0_5, %c0_6] : memref<32x32xf32, #tpu.memory_space<vmem>>, vector<32x32xf32>
    %cst_7 = arith.constant dense<0.000000e+00> : vector<32x16xf32>
    %8 = tpu.matmul %7, %6, %cst_7 {dimension_numbers = #tpu.dot_dimension_numbers<[1], [0], [0], [1], [0, 0, 1, 1], [], []>} : vector<32x32xf32>, vector<32x16xf32>, vector<32x16xf32> -> vector<32x16xf32>
    %c0_8 = arith.constant 0 : index
    %c0_9 = arith.constant 0 : index
    %9 = vector.load %arg5[%c0_8, %c0_9] : memref<32x1xf32, #tpu.memory_space<vmem>>, vector<32x1xf32>
    %10 = vector.broadcast %9 : vector<32x1xf32> to vector<32x16xf32>
    %11 = arith.addf %8, %10 : vector<32x16xf32>
    %12 = math.tanh %11 : vector<32x16xf32>
    %c0_10 = arith.constant 0 : index
    %c0_11 = arith.constant 0 : index
    %13 = vector.load %arg6[%c0_10, %c0_11] : memref<32x1xf32, #tpu.memory_space<vmem>>, vector<32x1xf32>
    %14 = vector.broadcast %13 : vector<32x1xf32> to vector<32x16xf32>
    %15 = arith.mulf %12, %14 : vector<32x16xf32>
    %cst_12 = arith.constant dense<0.000000e+00> : vector<16xf32>
    %16 = vector.multi_reduction <add>, %15, %cst_12 [0] : vector<32x16xf32> to vector<16xf32>
    %17 = vector.shape_cast %16 : vector<16xf32> to vector<1x16xf32>
    %c0_13 = arith.constant 0 : index
    %18 = memref.load %arg7[%c0_13] : memref<1xf32, #tpu.memory_space<smem>>
    %19 = vector.broadcast %18 : f32 to vector<1x16xf32>
    %20 = arith.addf %17, %19 : vector<1x16xf32>
    %c0_14 = arith.constant 0 : index
    %c0_15 = arith.constant 0 : index
    %21 = vector.load %arg9[%c0_14, %c0_15] : memref<32x16xf32, #tpu.memory_space<vmem>>, vector<32x16xf32>
    tpu.vector_store %arg9[%c0_14, %c0_15], %6 {strides = array<i32>} : memref<32x16xf32, #tpu.memory_space<vmem>>, vector<32x16xf32>,
    %c0_16 = arith.constant 0 : index
    %c0_17 = arith.constant 0 : index
    %22 = vector.load %arg8[%c0_16, %c0_17] : memref<1x16xf32, #tpu.memory_space<vmem>>, vector<1x16xf32>
    tpu.vector_store %arg8[%c0_16, %c0_17], %20 {strides = array<i32>} : memref<1x16xf32, #tpu.memory_space<vmem>>, vector<1x16xf32>,
    return
  }
  func.func @transform_0(%arg0: i32) -> (i32, i32) {
    %c0_i32 = arith.constant 0 : i32
    %c0_i32_0 = arith.constant 0 : i32
    return %c0_i32, %arg0 : i32, i32
  }
  func.func @transform_1(%arg0: i32) -> (i32, i32) {
    %c0_i32 = arith.constant 0 : i32
    %c0_i32_0 = arith.constant 0 : i32
    %c0_i32_1 = arith.constant 0 : i32
    return %c0_i32, %c0_i32_0 : i32, i32
  }
  func.func @transform_2(%arg0: i32) -> (i32, i32) {
    %c0_i32 = arith.constant 0 : i32
    %c0_i32_0 = arith.constant 0 : i32
    %c0_i32_1 = arith.constant 0 : i32
    return %c0_i32, %c0_i32_0 : i32, i32
  }
  func.func @transform_3(%arg0: i32) -> (i32, i32) {
    %c0_i32 = arith.constant 0 : i32
    %c0_i32_0 = arith.constant 0 : i32
    %c0_i32_1 = arith.constant 0 : i32
    return %c0_i32, %c0_i32_0 : i32, i32
  }
  func.func @transform_4(%arg0: i32) -> (i32, i32) {
    %c0_i32 = arith.constant 0 : i32
    %c0_i32_0 = arith.constant 0 : i32
    %c0_i32_1 = arith.constant 0 : i32
    return %c0_i32, %c0_i32_0 : i32, i32
  }
  func.func @transform_5(%arg0: i32) -> (i32, i32) {
    %c0_i32 = arith.constant 0 : i32
    %c0_i32_0 = arith.constant 0 : i32
    %c0_i32_1 = arith.constant 0 : i32
    return %c0_i32, %c0_i32_0 : i32, i32
  }
  func.func @transform_6(%arg0: i32) -> i32 {
    %c0_i32 = arith.constant 0 : i32
    %c0_i32_0 = arith.constant 0 : i32
    return %c0_i32 : i32
  }
  func.func @transform_7(%arg0: i32) -> (i32, i32) {
    %c0_i32 = arith.constant 0 : i32
    %c0_i32_0 = arith.constant 0 : i32
    return %c0_i32, %arg0 : i32, i32
  }
  func.func @transform_8(%arg0: i32) -> (i32, i32) {
    %c0_i32 = arith.constant 0 : i32
    %c0_i32_0 = arith.constant 0 : i32
    return %c0_i32, %arg0 : i32, i32
  }
}

</mosaic_0001>

<llo_original>
// kernel: tpu_custom_call.1
$region0: #{tpu_custom_call.1}
  #allocation0 [shape = 'u32[]', space=smem, size = 0x4, offset = 0x4, fixed_abs, tag = 'smem constant byte address 0x4 - core index']
  #allocation1 [shape = 'u32[144,128]{1,0:T(1,128)}', space=vmem, size = 0x12000, scoped, tag = 'internal scratch']
  #allocation2 [shape = 'f32[1]{0:T(128)S(6)}', space=smem, size = 0x200, scoped, tag = 'scoped memory for tpu_custom_call.1']
  %s0 = inlined_call_operand.vmem [shape: f32[32,16], index: 0, kind: input, shape index: {}]
  %s1 = inlined_call_operand.vmem [shape: f32[32,32], index: 1, kind: input, shape index: {}]
  %s2 = inlined_call_operand.vmem [shape: f32[32,1], index: 2, kind: input, shape index: {}]
  %s3 = inlined_call_operand.vmem [shape: f32[32,32], index: 3, kind: input, shape index: {}]
  %s4 = inlined_call_operand.vmem [shape: f32[32,1], index: 4, kind: input, shape index: {}]
  %s5 = inlined_call_operand.vmem [shape: f32[32,1], index: 5, kind: input, shape index: {}]
  %s6 = inlined_call_operand.<no memory space> [shape: f32[1], index: 6, kind: input, shape index: {}]
  %s7 = inlined_call_operand.hbm [shape: f32[1,16], index: 7, kind: output, shape index: {0}]
  %s8 = inlined_call_operand.vmem [shape: f32[32,16], index: 8, kind: output, shape index: {1}]
  %9 = xla_tuple %s7, %s8
  %s10 = sld [smem:[#allocation0]]
  $region46: #{tpu_custom_call.1} parent=0
    _
  %s12 = ssub.s32 1, %s10
  %s13 = scalar_select 0, %s12, %s10
  %14 = sst [smem:[#allocation2]] %s6
  $region1: #{tpu_custom_call.1} parent=0
    #allocation3 [shape = 'u8[512]{0}', space=vmem, size = 0x400, scoped, tag = 'output window, operand 0, single buffered']
    #allocation4 [shape = 's32[1]{0}', space=sflag, size = 0x4, scoped, tag = 'scoped memory for tpu_custom_call.1']
    %15 = vsyncpa [#allocation4], 0
    // Predicated region
    $region2: #{tpu_custom_call.1} parent=1 // pred_check
      _
    $region3: #{tpu_custom_call.1} parent=1 // pred_check_branch
      %17 = sbr.rel (0) target = $region5
    $region4: #{tpu_custom_call.1} parent=1 // pred_region
      _
    $region5: #{tpu_custom_call.1} parent=1 // pred_fallthru
      _
    // Predicated region
    $region6: #{tpu_custom_call.1} parent=1 // pred_check
      _
    $region7: #{tpu_custom_call.1} parent=1 // pred_check_branch
      %19 = sbr.rel (0) target = $region9
    $region8: #{tpu_custom_call.1} parent=1 // pred_region
      _
    $region9: #{tpu_custom_call.1} parent=1 // pred_fallthru
      _
    // Predicated region
    $region10: #{tpu_custom_call.1} parent=1 // pred_check
      _
    $region11: #{tpu_custom_call.1} parent=1 // pred_check_branch
      %21 = sbr.rel (0) target = $region13
    $region12: #{tpu_custom_call.1} parent=1 // pred_region
      _
    $region13: #{tpu_custom_call.1} parent=1 // pred_fallthru
      _
    // Predicated region
    $region14: #{tpu_custom_call.1} parent=1 // pred_check
      _
    $region15: #{tpu_custom_call.1} parent=1 // pred_check_branch
      %23 = sbr.rel (0) target = $region17
    $region16: #{tpu_custom_call.1} parent=1 // pred_region
      _
    $region17: #{tpu_custom_call.1} parent=1 // pred_fallthru
      _
    // Predicated region
    $region18: #{tpu_custom_call.1} parent=1 // pred_check
      _
    $region19: #{tpu_custom_call.1} parent=1 // pred_check_branch
      %25 = sbr.rel (0) target = $region21
    $region20: #{tpu_custom_call.1} parent=1 // pred_region
      _
    $region21: #{tpu_custom_call.1} parent=1 // pred_fallthru
      _
    // Predicated region
    $region22: #{tpu_custom_call.1} parent=1 // pred_check
      _
    $region23: #{tpu_custom_call.1} parent=1 // pred_check_branch
      %27 = sbr.rel (0) target = $region25
    $region24: #{tpu_custom_call.1} parent=1 // pred_region
      _
    $region25: #{tpu_custom_call.1} parent=1 // pred_fallthru
      _
    // Predicated region
    $region26: #{tpu_custom_call.1} parent=1 // pred_check
      _
    $region27: #{tpu_custom_call.1} parent=1 // pred_check_branch
      %29 = sbr.rel (0) target = $region29
    $region28: #{tpu_custom_call.1} parent=1 // pred_region
      _
    $region29: #{tpu_custom_call.1} parent=1 // pred_fallthru
      _
    %v30 = vld [vmem:[%s0] sm:$0xff]
    %v31 = vld [vmem:[%s0 + $0x8] sm:$0xff]
    %v32 = vld [vmem:[%s0 + $0x10] sm:$0xff]
    %v33 = vld [vmem:[%s0 + $0x18] sm:$0xff]
    %v34 = vld [vmem:[%s1] sm:$0xff]
    %v35 = vld [vmem:[%s1 + $0x8] sm:$0xff]
    %v36 = vld [vmem:[%s1 + $0x10] sm:$0xff]
    %v37 = vld [vmem:[%s1 + $0x18] sm:$0xff]
    %v38 = vld [vmem:[%s2] sm:$0xff]
    %v39 = vld [vmem:[%s2 + $0x8] sm:$0xff]
    %v40 = vld [vmem:[%s2 + $0x10] sm:$0xff]
    %v41 = vld [vmem:[%s2 + $0x18] sm:$0xff]
    %43 = vset.pattern.permute.xlu0 0
    %44 = vperm.xlu0 %43, %v38
    %v45 = vpop.permute.xlu0 %44
    %48 = vset.pattern.permute.xlu0 0
    %49 = vperm.xlu0 %48, %v39
    %v50 = vpop.permute.xlu0 %49
    %53 = vset.pattern.permute.xlu0 0
    %54 = vperm.xlu0 %53, %v40
    %v55 = vpop.permute.xlu0 %54
    %58 = vset.pattern.permute.xlu0 0
    %59 = vperm.xlu0 %58, %v41
    %v60 = vpop.permute.xlu0 %59
    %vm62 = vcmask 261120
    %v64 = vsel %vm62, %v34, 0
    %v67 = vsel %vm62, %v35, 0
    %v70 = vsel %vm62, %v36, 0
    %v73 = vsel %vm62, %v37, 0
    %75 = vmatprep.subr.mxu0 0.0
    %76 = vmatpush1.msra.mxu0 %v30
    %77 = vmatprep.subr.mxu0 0.0
    %78 = vmatpush1.msra.mxu0 %v31
    %79 = vmatprep.subr.mxu0 0.0
    %80 = vmatpush1.msra.mxu0 %v32
    %81 = vmatprep.subr.mxu0 0.0
    %82 = vmatpush1.msra.mxu0 %v33
    %83 = vmatprep.subr.mxu0 0.0
    %84 = vmatpush1.msra.mxu0 0.0
    %85 = vmatprep.subr.mxu0 0.0
    %86 = vmatpush1.msra.mxu0 0.0
    %87 = vmatprep.subr.mxu0 0.0
    %88 = vmatpush1.msra.mxu0 0.0
    %89 = vmatprep.subr.mxu0 0.0
    %90 = vmatpush1.msra.mxu0 0.0
    %91 = vmatprep.subr.mxu0 0.0
    %92 = vmatpush1.msra.mxu0 0.0
    %93 = vmatprep.subr.mxu0 0.0
    %94 = vmatpush1.msra.mxu0 0.0
    %95 = vmatprep.subr.mxu0 0.0
    %96 = vmatpush1.msra.mxu0 0.0
    %97 = vmatprep.subr.mxu0 0.0
    %98 = vmatpush1.msra.mxu0 0.0
    %99 = vmatprep.subr.mxu0 0.0
    %100 = vmatpush1.msra.mxu0 0.0
    %101 = vmatprep.subr.mxu0 0.0
    %102 = vmatpush1.msra.mxu0 0.0
    %103 = vmatprep.subr.mxu0 0.0
    %104 = vmatpush1.msra.mxu0 0.0
    %105 = vmatprep.subr.mxu0 0.0
    %106 = vmatpush1.msra.mxu0 0.0
    %107 = vmatprep.subr.mxu0 0.0
    %108 = vmatpush1.msra.mxu0 0.0
    %109 = vmatprep.subr.mxu0 0.0
    %110 = vmatpush1.msra.mxu0 0.0
    %111 = vmatprep.subr.mxu0 0.0
    %112 = vmatpush1.msra.mxu0 0.0
    %113 = vmatprep.subr.mxu0 0.0
    %114 = vmatpush1.msra.mxu0 0.0
    %115 = vmatprep.subr.mxu0 0.0
    %116 = vmatpush1.msra.mxu0 0.0
    %117 = vmatprep.subr.mxu0 0.0
    %118 = vmatpush1.msra.mxu0 0.0
    %119 = vmatprep.subr.mxu0 0.0
    %120 = vmatpush1.msra.mxu0 0.0
    %121 = vmatprep.subr.mxu0 0.0
    %122 = vmatpush1.msra.mxu0 0.0
    %123 = vmatprep.subr.mxu0 0.0
    %124 = vmatpush1.msra.mxu0 0.0
    %125 = vmatprep.subr.mxu0 0.0
    %126 = vmatpush1.msra.mxu0 0.0
    %127 = vmatprep.subr.mxu0 0.0
    %128 = vmatpush1.msra.mxu0 0.0
    %129 = vmatprep.subr.mxu0 0.0
    %130 = vmatpush1.msra.mxu0 0.0
    %131 = vmatprep.subr.mxu0 0.0
    %132 = vmatpush1.msra.mxu0 0.0
    %133 = vmatprep.subr.mxu0 0.0
    %134 = vmatpush1.msra.mxu0 0.0
    %135 = vmatprep.subr.mxu0 0.0
    %136 = vmatpush1.msra.mxu0 0.0
    %137 = vmatprep.subr.mxu0 0.0
    %138 = vmatpush1.msra.mxu0 0.0
    %139 = vmatprep.mubr.f32.mxu0 0.0
    %140 = vmatmul.mubr.f32.gmra.mrb[0].mxu0 %v64
    %v141 = vpop.f32.mrb[0].mxu0
    %v142 = vadd.f32 %v45, %v141
    %v143 = vpop.f32.mrb[0].mxu0
    %144 = vmatprep.mubr.f32.mxu0 0.0
    %145 = vmatmul.mubr.f32.gmra.mrb[0].mxu0 %v67
    %v146 = vpop.f32.mrb[0].mxu0
    %v147 = vadd.f32 %v50, %v146
    %v148 = vpop.f32.mrb[0].mxu0
    %149 = vmatprep.mubr.f32.mxu0 0.0
    %150 = vmatmul.mubr.f32.gmra.mrb[0].mxu0 %v70
    %v151 = vpop.f32.mrb[0].mxu0
    %v152 = vadd.f32 %v55, %v151
    %v153 = vpop.f32.mrb[0].mxu0
    %154 = vmatprep.mubr.f32.mxu0 0.0
    %155 = vmatmul.mubr.f32.gmra.mrb[0].mxu0 %v73
    %v156 = vpop.f32.mrb[0].mxu0
    %v157 = vadd.f32 %v60, %v156
    %v158 = vpop.f32.mrb[0].mxu0
    %159 = vdwg.mxu0
    %v160 = vtanh.pop %v142
    %v161 = vtanh.pop %v147
    %v162 = vtanh.pop %v152
    %v163 = vtanh.pop %v157
    %v164 = vld [vmem:[%s3] sm:$0xff]
    %v165 = vld [vmem:[%s3 + $0x8] sm:$0xff]
    %v166 = vld [vmem:[%s3 + $0x10] sm:$0xff]
    %v167 = vld [vmem:[%s3 + $0x18] sm:$0xff]
    %v168 = vld [vmem:[%s4] sm:$0xff]
    %v169 = vld [vmem:[%s4 + $0x8] sm:$0xff]
    %v170 = vld [vmem:[%s4 + $0x10] sm:$0xff]
    %v171 = vld [vmem:[%s4 + $0x18] sm:$0xff]
    %173 = vset.pattern.permute.xlu0 0
    %174 = vperm.xlu0 %173, %v168
    %v175 = vpop.permute.xlu0 %174
    %178 = vset.pattern.permute.xlu0 0
    %179 = vperm.xlu0 %178, %v169
    %v180 = vpop.permute.xlu0 %179
    %183 = vset.pattern.permute.xlu0 0
    %184 = vperm.xlu0 %183, %v170
    %v185 = vpop.permute.xlu0 %184
    %188 = vset.pattern.permute.xlu0 0
    %189 = vperm.xlu0 %188, %v171
    %v190 = vpop.permute.xlu0 %189
    %v193 = vsel %vm62, %v164, 0
    %v196 = vsel %vm62, %v165, 0
    %v199 = vsel %vm62, %v166, 0
    %v202 = vsel %vm62, %v167, 0
    %204 = vmatprep.subr.mxu0 0.0
    %205 = vmatpush1.msra.mxu0 %v160
    %206 = vmatprep.subr.mxu0 0.0
    %207 = vmatpush1.msra.mxu0 %v161
    %208 = vmatprep.subr.mxu0 0.0
    %209 = vmatpush1.msra.mxu0 %v162
    %210 = vmatprep.subr.mxu0 0.0
    %211 = vmatpush1.msra.mxu0 %v163
    %212 = vmatprep.subr.mxu0 0.0
    %213 = vmatpush1.msra.mxu0 0.0
    %214 = vmatprep.subr.mxu0 0.0
    %215 = vmatpush1.msra.mxu0 0.0
    %216 = vmatprep.subr.mxu0 0.0
    %217 = vmatpush1.msra.mxu0 0.0
    %218 = vmatprep.subr.mxu0 0.0
    %219 = vmatpush1.msra.mxu0 0.0
    %220 = vmatprep.subr.mxu0 0.0
    %221 = vmatpush1.msra.mxu0 0.0
    %222 = vmatprep.subr.mxu0 0.0
    %223 = vmatpush1.msra.mxu0 0.0
    %224 = vmatprep.subr.mxu0 0.0
    %225 = vmatpush1.msra.mxu0 0.0
    %226 = vmatprep.subr.mxu0 0.0
    %227 = vmatpush1.msra.mxu0 0.0
    %228 = vmatprep.subr.mxu0 0.0
    %229 = vmatpush1.msra.mxu0 0.0
    %230 = vmatprep.subr.mxu0 0.0
    %231 = vmatpush1.msra.mxu0 0.0
    %232 = vmatprep.subr.mxu0 0.0
    %233 = vmatpush1.msra.mxu0 0.0
    %234 = vmatprep.subr.mxu0 0.0
    %235 = vmatpush1.msra.mxu0 0.0
    %236 = vmatprep.subr.mxu0 0.0
    %237 = vmatpush1.msra.mxu0 0.0
    %238 = vmatprep.subr.mxu0 0.0
    %239 = vmatpush1.msra.mxu0 0.0
    %240 = vmatprep.subr.mxu0 0.0
    %241 = vmatpush1.msra.mxu0 0.0
    %242 = vmatprep.subr.mxu0 0.0
    %243 = vmatpush1.msra.mxu0 0.0
    %244 = vmatprep.subr.mxu0 0.0
    %245 = vmatpush1.msra.mxu0 0.0
    %246 = vmatprep.subr.mxu0 0.0
    %247 = vmatpush1.msra.mxu0 0.0
    %248 = vmatprep.subr.mxu0 0.0
    %249 = vmatpush1.msra.mxu0 0.0
    %250 = vmatprep.subr.mxu0 0.0
    %251 = vmatpush1.msra.mxu0 0.0
    %252 = vmatprep.subr.mxu0 0.0
    %253 = vmatpush1.msra.mxu0 0.0
    %254 = vmatprep.subr.mxu0 0.0
    %255 = vmatpush1.msra.mxu0 0.0
    %256 = vmatprep.subr.mxu0 0.0
    %257 = vmatpush1.msra.mxu0 0.0
    %258 = vmatprep.subr.mxu0 0.0
    %259 = vmatpush1.msra.mxu0 0.0
    %260 = vmatprep.subr.mxu0 0.0
    %261 = vmatpush1.msra.mxu0 0.0
    %262 = vmatprep.subr.mxu0 0.0
    %263 = vmatpush1.msra.mxu0 0.0
    %264 = vmatprep.subr.mxu0 0.0
    %265 = vmatpush1.msra.mxu0 0.0
    %266 = vmatprep.subr.mxu0 0.0
    %267 = vmatpush1.msra.mxu0 0.0
    %268 = vmatprep.mubr.f32.mxu0 0.0
    %269 = vmatmul.mubr.f32.gmra.mrb[0].mxu0 %v193
    %v270 = vpop.f32.mrb[0].mxu0
    %v271 = vadd.f32 %v175, %v270
    %v272 = vpop.f32.mrb[0].mxu0
    %273 = vmatprep.mubr.f32.mxu0 0.0
    %274 = vmatmul.mubr.f32.gmra.mrb[0].mxu0 %v196
    %v275 = vpop.f32.mrb[0].mxu0
    %v276 = vadd.f32 %v180, %v275
    %v277 = vpop.f32.mrb[0].mxu0
    %278 = vmatprep.mubr.f32.mxu0 0.0
    %279 = vmatmul.mubr.f32.gmra.mrb[0].mxu0 %v199
    %v280 = vpop.f32.mrb[0].mxu0
    %v281 = vadd.f32 %v185, %v280
    %v282 = vpop.f32.mrb[0].mxu0
    %283 = vmatprep.mubr.f32.mxu0 0.0
    %284 = vmatmul.mubr.f32.gmra.mrb[0].mxu0 %v202
    %v285 = vpop.f32.mrb[0].mxu0
    %v286 = vadd.f32 %v190, %v285
    %v287 = vpop.f32.mrb[0].mxu0
    %288 = vdwg.mxu0
    %v289 = vtanh.pop %v271
    %v290 = vtanh.pop %v276
    %v291 = vtanh.pop %v281
    %v292 = vtanh.pop %v286
    %v293 = vld [vmem:[%s5] sm:$0xff]
    %v294 = vld [vmem:[%s5 + $0x8] sm:$0xff]
    %v295 = vld [vmem:[%s5 + $0x10] sm:$0xff]
    %v296 = vld [vmem:[%s5 + $0x18] sm:$0xff]
    %298 = vset.pattern.permute.xlu0 0
    %299 = vperm.xlu0 %298, %v293
    %v300 = vpop.permute.xlu0 %299
    %303 = vset.pattern.permute.xlu0 0
    %304 = vperm.xlu0 %303, %v294
    %v305 = vpop.permute.xlu0 %304
    %308 = vset.pattern.permute.xlu0 0
    %309 = vperm.xlu0 %308, %v295
    %v310 = vpop.permute.xlu0 %309
    %313 = vset.pattern.permute.xlu0 0
    %314 = vperm.xlu0 %313, %v296
    %v315 = vpop.permute.xlu0 %314
    %v317 = vmul.f32 %v289, %v300
    %v318 = vmul.f32 %v290, %v305
    %v319 = vmul.f32 %v291, %v310
    %v320 = vmul.f32 %v292, %v315
    %vm321 = vcmask 130048
    %v322 = vsel %vm321, %v317, 0.0
    %v323 = vsel %vm321, %v318, 0.0
    %v324 = vadd.f32 %v322, %v323
    %v325 = vsel %vm321, %v319, 0.0
    %v326 = vadd.f32 %v324, %v325
    %v327 = vsel %vm321, %v320, 0.0
    %v328 = vadd.f32 %v326, %v327
    %v329 = vrot.slane %v328, 4
    %v330 = vadd.f32 %v328, %v329
    %v331 = vrot.slane %v330, 2
    %v332 = vadd.f32 %v330, %v331
    %v333 = vrot.slane %v332, 1
    %v334 = vadd.f32 %v332, %v333
    %s335 = sld [smem:[#allocation2]]
    %v336 = vstv %s335
    %v337 = vadd.f32 %v334, %v336
    %338 = vst.msk [vmem:[%s8] sm:$0xff] %vm321, %v160
    %339 = vst.msk [vmem:[%s8 + $0x8] sm:$0xff] %vm321, %v161
    %340 = vst.msk [vmem:[%s8 + $0x10] sm:$0xff] %vm321, %v162
    %341 = vst.msk [vmem:[%s8 + $0x18] sm:$0xff] %vm321, %v163
    %vm342 = vcmask 122880
    %343 = vst.msk [vmem:[#allocation3] sm:$0x1] %vm342, %v337
    // Predicated region
    $region30: #{tpu_custom_call.1} parent=1 // pred_check
      _
    $region31: #{tpu_custom_call.1} parent=1 // pred_check_branch
      %345 = sbr.rel (0) target = $region33
    $region32: #{tpu_custom_call.1} parent=1 // pred_region
      %s347 = ssub.s32 16, 16
      %348 = vsyncadd [#allocation4], %s347
      %s350 = sshll.u32 [#allocation3], 4
      %s351 = int_to_ptr.vmem [resolvable:$true] %s350
      %353 = dma.vmem_to_hbm [thread:$0]  %s351, 16, %s7, [#allocation4]
    $region33: #{tpu_custom_call.1} parent=1 // pred_fallthru
      _
    // Predicated region
    $region34: #{tpu_custom_call.1} parent=1 // pred_check
      _
    $region35: #{tpu_custom_call.1} parent=1 // pred_check_branch
      %355 = sbr.rel (0) target = $region37
    $region36: #{tpu_custom_call.1} parent=1 // pred_region
      _
    $region37: #{tpu_custom_call.1} parent=1 // pred_fallthru
      _
    // Predicated region
    $region38: #{tpu_custom_call.1} parent=1 // pred_check
      _
    $region39: #{tpu_custom_call.1} parent=1 // pred_check_branch
      %357 = sbr.rel (0) target = $region41
    $region40: #{tpu_custom_call.1} parent=1 // pred_region
      %358 = dma.done [#allocation4], 16
    $region41: #{tpu_custom_call.1} parent=1 // pred_fallthru
      _
    // Predicated region
    $region42: #{tpu_custom_call.1} parent=1 // pred_check
      _
    $region43: #{tpu_custom_call.1} parent=1 // pred_check_branch
      %360 = sbr.rel (0) target = $region45
    $region44: #{tpu_custom_call.1} parent=1 // pred_region
      _
    $region45: #{tpu_custom_call.1} parent=1 // pred_fallthru
      _
    %361 = vsyncpa [#allocation4], 1

</llo_original>
